<compile_context>
chip_gen: v7x
topology: tpu7x:2x2x1
jax: 0.10.0
libtpu: 0.0.40
codegen_flags: <defaults>
</compile_context>

<pallas_src>
import numpy as np
import jax
import jax.numpy as jnp
from jax import lax
from jax.experimental import pallas as pl
from jax.experimental.pallas import tpu as pltpu

# ---------------- model sizes (small, synthetic) ----------------
B = 2       # molecules (batch)
A = 8       # atoms per molecule
F = 32      # density feature channels
H = 64      # nnmod hidden width
NSPEC = 2   # number of species

AF = A * F  # 256 lanes: per-molecule (atom-major, feature-minor) flattening
AH = A * H  # 512 lanes: per-molecule (atom-major, hidden-minor) flattening


# ---------------- Pallas kernel: whole-batch polarizability ----------------
def _pol_kernel(l_ref, w1b_ref, b1_ref, w2_ref, cs_ref, out_ref):
    """l_ref:(4B, A*F) stacked LHS rows [x(b=0..B-1); t(b,c) b-major,c-minor];
    w1b_ref:(A*F, A*H) block-diagonal W1; b1_ref/w2_ref/cs_ref:(1, A*H) lane-tiled
    b1 / W2 / column-sum(W1); out_ref:(B, 3, 3) per-molecule polarizability."""
    # One fused MXU matmul for all 4B rows (MLP pre-activations + field Jacobians).
    m = jnp.dot(l_ref[...], w1b_ref[...],
                preferred_element_type=jnp.float32)          # (4B, A*H)

    # per-atom MLP non-linearity and its z-derivatives (lane-dense, (B, A*H))
    z = m[0:B, :] + b1_ref[...]
    h = jnp.tanh(z)
    sech2 = 1.0 - h * h
    d1 = sech2 * w2_ref[...]                                 # W2_k * sech^2(z)
    d2 = -2.0 * h * d1                                       # W2_k * d/dz sech^2(z)

    # diagonal (direction-independent) term: s_b = sum_{a,k} d1 * colsum_k
    # (colsum hoisted to the wrapper; one lane reduction per molecule row)
    s = jnp.sum(d1 * cs_ref[...], axis=1, keepdims=True)     # (B, 1)

    eye3 = (lax.broadcasted_iota(jnp.int32, (3, 3), 0)
            == lax.broadcasted_iota(jnp.int32, (3, 3), 1)).astype(jnp.float32)

    # Per-molecule Gram on the MXU:  G_b[c,c'] = sum_{a,k} d2 * u_c * u_c'
    # pol_b = 4*G_b + 2*s_b*I.  Static B-loop (B is tiny); for large B the
    # molecules would be tiled over a "parallel" grid axis instead.
    for b in range(B):
        ub = m[B + 3 * b:B + 3 * (b + 1), :]                 # (3, A*H)  u_c rows
        wb = ub * d2[b:b + 1, :]                             # d2-weighted
        gb = lax.dot_general(wb, ub, (((1,), (1,)), ((), ())),
                             preferred_element_type=jnp.float32)   # (3, 3)
        out_ref[b, :, :] = 4.0 * gb + 2.0 * s[b:b + 1, 0:1] * eye3


def _pol_pallas(lhs, w1blk, b1t, w2t, cst):
    out3 = pl.pallas_call(
        _pol_kernel,
        out_shape=jax.ShapeDtypeStruct((B, 3, 3), jnp.float32),
        grid=(1,),  # whole batch in one step: per-step overhead amortized away
        in_specs=[
            pl.BlockSpec((4 * B, AF), lambda i: (0, 0)),
            pl.BlockSpec((AF, AH), lambda i: (0, 0)),
            pl.BlockSpec((1, AH), lambda i: (0, 0)),
            pl.BlockSpec((1, AH), lambda i: (0, 0)),
            pl.BlockSpec((1, AH), lambda i: (0, 0)),
        ],
        out_specs=pl.BlockSpec((B, 3, 3), lambda i: (0, 0, 0)),
        compiler_params=pltpu.CompilerParams(dimension_semantics=("arbitrary",)),
    )(lhs, w1blk, b1t, w2t, cst)
    return out3.reshape(B, 9)


# ---------------- plain-JAX glue: geometry / neighbor-list scatter ----------------
# TODO(synk): the neighbor-list scatter-add has no clean Pallas equivalent at this
# size; it stays in plain JAX glue.
def compute_g(cart, species, atom_index, shifts, coeff, alpha):
    """g[b,a,f,c] = sum_{pairs p: i==a} coeff[species_j, f]*exp(-alpha_f*|r|^2)*r_c."""
    Bb, Aa, _ = cart.shape
    i_idx = atom_index[0]                            # [B, P]
    j_idx = atom_index[1]
    batch = jnp.arange(Bb)[:, None]
    cart_i = cart[batch, i_idx]                      # [B, P, 3]
    cart_j = cart[batch, j_idx]
    rvec = cart_j + shifts - cart_i                  # [B, P, 3]
    r2 = jnp.sum(rvec * rvec, axis=-1)               # [B, P]
    spec_j = species[batch, j_idx]                   # [B, P]
    cj = coeff[spec_j]                               # [B, P, F]
    radial = jnp.exp(-alpha[None, None, :] * r2[..., None])   # [B, P, F]
    contrib = (cj * radial)[..., None] * rvec[:, :, None, :]  # [B, P, F, 3]
    batch2 = jnp.broadcast_to(batch, i_idx.shape)
    g = jnp.zeros((Bb, Aa, coeff.shape[1], 3), jnp.float32)
    g = g.at[batch2, i_idx].add(contrib)
    return g


# ---------------- synthetic density / nnmod (pure-JAX reference modules) ----------
def density_fn(cart, ef, species, atom_index, shifts, params):
    g = compute_g(cart, species, atom_index, shifts, params["coeff"], params["alpha"])
    t = g + ef[:, None, None, :]                     # [B, A, F, 3]
    return jnp.sum(t * t, axis=-1)                   # [B, A, F]


def nnmod_fn(rho, species, params):
    x = rho + params["emb"][species]                 # [B, A, F]
    h = jnp.tanh(x @ params["w1"] + params["b1"])    # [B, A, H]
    return h @ params["w2"] + params["b2"]           # [B, A]


# ---------------- Property.forward: Pallas version ----------------
@jax.jit
def property_forward(cart, ef, numatoms, species, atom_index, shifts, params):
    # neighbor-list scatter + field coupling stay as wrapper glue
    g = compute_g(cart, species, atom_index, shifts, params["coeff"], params["alpha"])
    t = g + ef[:, None, None, :]                               # [B, A, F, 3]

    # ---- layout plumbing only: lane-dense, pre-flattened kernel operands ----
    # t rows ordered (b-major, c-minor); lanes = atom-major, feature-minor
    t_rows = jnp.transpose(t, (0, 3, 1, 2)).reshape(3 * B, AF)  # (3B, A*F)
    rho = jnp.sum(t * t, axis=-1)                               # [B, A, F]
    x_rows = (rho + params["emb"][species]).reshape(B, AF)      # (B, A*F)
    lhs = jnp.concatenate([x_rows, t_rows], axis=0)             # (4B, A*F)

    # block-diagonal W1 so one matmul handles all atoms in a lane-dense layout
    w1blk = jnp.kron(jnp.eye(A, dtype=jnp.float32), params["w1"])   # (A*F, A*H)
    b1t = jnp.tile(params["b1"], A)[None, :]                        # (1, A*H)
    w2t = jnp.tile(params["w2"], A)[None, :]                        # (1, A*H)
    cst = jnp.tile(jnp.sum(params["w1"], axis=0), A)[None, :]       # hoisted colsum

    pol = _pol_pallas(lhs, w1blk, b1t, w2t, cst)
    return (pol,)                          # matches (pol.permute(1,0,2).reshape(-1,9),)


# ---------------- Property.forward: pure-JAX autodiff reference --------------------
def property_forward_ref(cart, ef, numatoms, species, atom_index, shifts, params):
    def energy(ef_):
        rho = density_fn(cart, ef_, species, atom_index, shifts, params)
        out = nnmod_fn(rho, species, params).reshape(numatoms.shape[0], -1)
        return jnp.sum(out)

    dipole = jax.grad(energy)                                    # ef -> [B, 3]
    d_total = lambda ef_: jnp.sum(dipole(ef_), axis=0)           # [3]
    pol = jax.jacfwd(d_total)(ef)                                # [3, B, 3]
    return (jnp.transpose(pol, (1, 0, 2)).reshape(-1, 9),)


if __name__ == "__main__":
    key = jax.random.PRNGKey(0)
    ks = jax.random.split(key, 9)

    cart = (1.5 * jax.random.normal(ks[0], (B, A, 3))).astype(jnp.float32)
    ef = (0.1 * jax.random.normal(ks[1], (B, 3))).astype(jnp.float32)
    numatoms = jnp.full((B,), A, dtype=jnp.int32)
    species = jax.random.randint(ks[2], (B, A), 0, NSPEC)

    # all ordered pairs i != j within each molecule, zero PBC shifts
    ii, jj = np.meshgrid(np.arange(A), np.arange(A), indexing="ij")
    mask = ii != jj
    pair_i = ii[mask]
    pair_j = jj[mask]
    P = pair_i.shape[0]
    atom_index = jnp.asarray(
        np.stack([np.broadcast_to(pair_i, (B, P)),
                  np.broadcast_to(pair_j, (B, P))], axis=0), dtype=jnp.int32)
    shifts = jnp.zeros((B, P, 3), jnp.float32)

    params = dict(
        coeff=(0.3 * jax.random.normal(ks[3], (NSPEC, F))).astype(jnp.float32),
        alpha=jnp.linspace(0.3, 1.2, F, dtype=jnp.float32),
        emb=(0.1 * jax.random.normal(ks[4], (NSPEC, F))).astype(jnp.float32),
        w1=(jax.random.normal(ks[5], (F, H)) / np.sqrt(F)).astype(jnp.float32),
        b1=(0.1 * jax.random.normal(ks[6], (H,))).astype(jnp.float32),
        w2=(jax.random.normal(ks[7], (H,)) / np.sqrt(H)).astype(jnp.float32),
        b2=(0.05 * jax.random.normal(ks[8], ())).astype(jnp.float32),
    )

    out = property_forward(cart, ef, numatoms, species, atom_index, shifts, params)[0]
    out = jax.block_until_ready(out)

    ref = property_forward_ref(cart, ef, numatoms, species, atom_index, shifts, params)[0]
    ref = jax.block_until_ready(ref)

    assert out.shape == (B, 9), out.shape
    assert jnp.allclose(out, ref, rtol=2e-3, atol=2e-4), (
        "max abs diff", float(jnp.max(jnp.abs(out - ref))))
    print("KERNEL_OK")
</pallas_src>

<mosaic_0001>
module attributes {stable_mosaic.version = 11 : i64} {
  func.func @_pol_kernel(%arg0: i32, %arg1: memref<8x256xf32, #tpu.memory_space<vmem>>, %arg2: memref<256x512xf32, #tpu.memory_space<vmem>>, %arg3: memref<1x512xf32, #tpu.memory_space<vmem>>, %arg4: memref<1x512xf32, #tpu.memory_space<vmem>>, %arg5: memref<1x512xf32, #tpu.memory_space<vmem>>, %arg6: memref<2x3x3xf32, #tpu.memory_space<vmem>>) attributes {dimension_semantics = [#tpu.dimension_semantics<arbitrary>], iteration_bounds = array<i64: 1>, scalar_prefetch = 0 : i64, scratch_operands = 0 : i64, tpu.core_type = #tpu.core_type<tc>, window_params = [{pipeline_mode = #tpu.pipeline_mode<synchronous>, transform_indices = @transform_0, window_bounds = array<i64: 8, 256>}, {pipeline_mode = #tpu.pipeline_mode<synchronous>, transform_indices = @transform_1, window_bounds = array<i64: 256, 512>}, {pipeline_mode = #tpu.pipeline_mode<synchronous>, transform_indices = @transform_2, window_bounds = array<i64: 1, 512>}, {pipeline_mode = #tpu.pipeline_mode<synchronous>, transform_indices = @transform_3, window_bounds = array<i64: 1, 512>}, {pipeline_mode = #tpu.pipeline_mode<synchronous>, transform_indices = @transform_4, window_bounds = array<i64: 1, 512>}, {pipeline_mode = #tpu.pipeline_mode<synchronous>, transform_indices = @transform_5, window_bounds = array<i64: 2, 3, 3>}]} {
    %c0 = arith.constant 0 : index
    %c0_0 = arith.constant 0 : index
    %0 = vector.load %arg1[%c0, %c0_0] : memref<8x256xf32, #tpu.memory_space<vmem>>, vector<8x256xf32>
    %c0_1 = arith.constant 0 : index
    %c0_2 = arith.constant 0 : index
    %1 = vector.load %arg2[%c0_1, %c0_2] : memref<256x512xf32, #tpu.memory_space<vmem>>, vector<256x512xf32>
    %cst = arith.constant dense<0.000000e+00> : vector<8x512xf32>
    %2 = tpu.matmul %0, %1, %cst {dimension_numbers = #tpu.dot_dimension_numbers<[1], [0], [0], [1], [0, 0, 1, 1], [], []>} : vector<8x256xf32>, vector<256x512xf32>, vector<8x512xf32> -> vector<8x512xf32>
    %3 = vector.extract_strided_slice %2 {offsets = [0, 0], sizes = [2, 512], strides = [1, 1]} : vector<8x512xf32> to vector<2x512xf32>
    %c0_3 = arith.constant 0 : index
    %c0_4 = arith.constant 0 : index
    %4 = vector.load %arg3[%c0_3, %c0_4] : memref<1x512xf32, #tpu.memory_space<vmem>>, vector<1x512xf32>
    %5 = vector.broadcast %4 : vector<1x512xf32> to vector<2x512xf32>
    %6 = arith.addf %3, %5 : vector<2x512xf32>
    %7 = math.tanh %6 : vector<2x512xf32>
    %8 = arith.mulf %7, %7 : vector<2x512xf32>
    %cst_5 = arith.constant 1.000000e+00 : f32
    %9 = vector.broadcast %cst_5 : f32 to vector<2x512xf32>
    %10 = arith.subf %9, %8 : vector<2x512xf32>
    %c0_6 = arith.constant 0 : index
    %c0_7 = arith.constant 0 : index
    %11 = vector.load %arg4[%c0_6, %c0_7] : memref<1x512xf32, #tpu.memory_space<vmem>>, vector<1x512xf32>
    %12 = vector.broadcast %11 : vector<1x512xf32> to vector<2x512xf32>
    %13 = arith.mulf %10, %12 : vector<2x512xf32>
    %cst_8 = arith.constant -2.000000e+00 : f32
    %14 = vector.broadcast %cst_8 : f32 to vector<2x512xf32>
    %15 = arith.mulf %14, %7 : vector<2x512xf32>
    %16 = arith.mulf %15, %13 : vector<2x512xf32>
    %c0_9 = arith.constant 0 : index
    %c0_10 = arith.constant 0 : index
    %17 = vector.load %arg5[%c0_9, %c0_10] : memref<1x512xf32, #tpu.memory_space<vmem>>, vector<1x512xf32>
    %18 = vector.broadcast %17 : vector<1x512xf32> to vector<2x512xf32>
    %19 = arith.mulf %13, %18 : vector<2x512xf32>
    %cst_11 = arith.constant dense<0.000000e+00> : vector<2xf32>
    %20 = vector.multi_reduction <add>, %19, %cst_11 [1] : vector<2x512xf32> to vector<2xf32>
    %21 = vector.shape_cast %20 : vector<2xf32> to vector<2x1xf32>
    %22 = tpu.iota {dimensions = array<i32: 0>} : vector<3x3xi32>
    %23 = tpu.iota {dimensions = array<i32: 1>} : vector<3x3xi32>
    %24 = arith.cmpi eq, %22, %23 : vector<3x3xi32>
    %25 = arith.extui %24 : vector<3x3xi1> to vector<3x3xi32>
    %26 = arith.sitofp %25 : vector<3x3xi32> to vector<3x3xf32>
    %27 = vector.extract_strided_slice %2 {offsets = [2, 0], sizes = [3, 512], strides = [1, 1]} : vector<8x512xf32> to vector<3x512xf32>
    %28 = vector.extract_strided_slice %16 {offsets = [0, 0], sizes = [1, 512], strides = [1, 1]} : vector<2x512xf32> to vector<1x512xf32>
    %29 = vector.broadcast %28 : vector<1x512xf32> to vector<3x512xf32>
    %30 = arith.mulf %27, %29 : vector<3x512xf32>
    %cst_12 = arith.constant dense<0.000000e+00> : vector<3x3xf32>
    %31 = tpu.matmul %30, %27, %cst_12 {dimension_numbers = #tpu.dot_dimension_numbers<[1], [1], [0], [0], [0, 0, 1, 0], [], []>} : vector<3x512xf32>, vector<3x512xf32>, vector<3x3xf32> -> vector<3x3xf32>
    %cst_13 = arith.constant 4.000000e+00 : f32
    %32 = vector.broadcast %cst_13 : f32 to vector<3x3xf32>
    %33 = arith.mulf %32, %31 : vector<3x3xf32>
    %34 = vector.extract_strided_slice %21 {offsets = [0, 0], sizes = [1, 1], strides = [1, 1]} : vector<2x1xf32> to vector<1x1xf32>
    %cst_14 = arith.constant 2.000000e+00 : f32
    %35 = vector.broadcast %cst_14 : f32 to vector<1x1xf32>
    %36 = arith.mulf %35, %34 : vector<1x1xf32>
    %37 = vector.broadcast %36 : vector<1x1xf32> to vector<3x3xf32>
    %38 = arith.mulf %37, %26 : vector<3x3xf32>
    %39 = arith.addf %33, %38 : vector<3x3xf32>
    %c0_15 = arith.constant 0 : index
    %c0_16 = arith.constant 0 : index
    %c0_17 = arith.constant 0 : index
    %40 = vector.load %arg6[%c0_15, %c0_16, %c0_17] : memref<2x3x3xf32, #tpu.memory_space<vmem>>, vector<1x3x3xf32>
    %41 = vector.shape_cast %40 : vector<1x3x3xf32> to vector<3x3xf32>
    %42 = vector.shape_cast %39 : vector<3x3xf32> to vector<1x3x3xf32>
    tpu.vector_store %arg6[%c0_15, %c0_16, %c0_17], %42 {strides = array<i32>} : memref<2x3x3xf32, #tpu.memory_space<vmem>>, vector<1x3x3xf32>,
    %43 = vector.extract_strided_slice %2 {offsets = [5, 0], sizes = [3, 512], strides = [1, 1]} : vector<8x512xf32> to vector<3x512xf32>
    %44 = vector.extract_strided_slice %16 {offsets = [1, 0], sizes = [1, 512], strides = [1, 1]} : vector<2x512xf32> to vector<1x512xf32>
    %45 = vector.broadcast %44 : vector<1x512xf32> to vector<3x512xf32>
    %46 = arith.mulf %43, %45 : vector<3x512xf32>
    %cst_18 = arith.constant dense<0.000000e+00> : vector<3x3xf32>
    %47 = tpu.matmul %46, %43, %cst_18 {dimension_numbers = #tpu.dot_dimension_numbers<[1], [1], [0], [0], [0, 0, 1, 0], [], []>} : vector<3x512xf32>, vector<3x512xf32>, vector<3x3xf32> -> vector<3x3xf32>
    %cst_19 = arith.constant 4.000000e+00 : f32
    %48 = vector.broadcast %cst_19 : f32 to vector<3x3xf32>
    %49 = arith.mulf %48, %47 : vector<3x3xf32>
    %50 = vector.extract_strided_slice %21 {offsets = [1, 0], sizes = [1, 1], strides = [1, 1]} : vector<2x1xf32> to vector<1x1xf32>
    %cst_20 = arith.constant 2.000000e+00 : f32
    %51 = vector.broadcast %cst_20 : f32 to vector<1x1xf32>
    %52 = arith.mulf %51, %50 : vector<1x1xf32>
    %53 = vector.broadcast %52 : vector<1x1xf32> to vector<3x3xf32>
    %54 = arith.mulf %53, %26 : vector<3x3xf32>
    %55 = arith.addf %49, %54 : vector<3x3xf32>
    %c1 = arith.constant 1 : index
    %c0_21 = arith.constant 0 : index
    %c0_22 = arith.constant 0 : index
    %56 = vector.load %arg6[%c1, %c0_21, %c0_22] : memref<2x3x3xf32, #tpu.memory_space<vmem>>, vector<1x3x3xf32>
    %57 = vector.shape_cast %56 : vector<1x3x3xf32> to vector<3x3xf32>
    %58 = vector.shape_cast %55 : vector<3x3xf32> to vector<1x3x3xf32>
    tpu.vector_store %arg6[%c1, %c0_21, %c0_22], %58 {strides = array<i32>} : memref<2x3x3xf32, #tpu.memory_space<vmem>>, vector<1x3x3xf32>,
    return
  }
  func.func @transform_0(%arg0: i32) -> (i32, i32) {
    %c0_i32 = arith.constant 0 : i32
    %c0_i32_0 = arith.constant 0 : i32
    %c0_i32_1 = arith.constant 0 : i32
    return %c0_i32, %c0_i32_0 : i32, i32
  }
  func.func @transform_1(%arg0: i32) -> (i32, i32) {
    %c0_i32 = arith.constant 0 : i32
    %c0_i32_0 = arith.constant 0 : i32
    %c0_i32_1 = arith.constant 0 : i32
    return %c0_i32, %c0_i32_0 : i32, i32
  }
  func.func @transform_2(%arg0: i32) -> (i32, i32) {
    %c0_i32 = arith.constant 0 : i32
    %c0_i32_0 = arith.constant 0 : i32
    %c0_i32_1 = arith.constant 0 : i32
    return %c0_i32, %c0_i32_0 : i32, i32
  }
  func.func @transform_3(%arg0: i32) -> (i32, i32) {
    %c0_i32 = arith.constant 0 : i32
    %c0_i32_0 = arith.constant 0 : i32
    %c0_i32_1 = arith.constant 0 : i32
    return %c0_i32, %c0_i32_0 : i32, i32
  }
  func.func @transform_4(%arg0: i32) -> (i32, i32) {
    %c0_i32 = arith.constant 0 : i32
    %c0_i32_0 = arith.constant 0 : i32
    %c0_i32_1 = arith.constant 0 : i32
    return %c0_i32, %c0_i32_0 : i32, i32
  }
  func.func @transform_5(%arg0: i32) -> (i32, i32, i32) {
    %c0_i32 = arith.constant 0 : i32
    %c0_i32_0 = arith.constant 0 : i32
    %c0_i32_1 = arith.constant 0 : i32
    %c0_i32_2 = arith.constant 0 : i32
    return %c0_i32, %c0_i32_0, %c0_i32_1 : i32, i32, i32
  }
}

</mosaic_0001>

<llo_original>
// kernel: neg.0
$region0: #{neg.0}
  #allocation0 [shape = 's32[1]{0}', space=sflag, size = 0x4, scoped, tag = 'scoped memory for neg.0']
  %s0 = inlined_call_operand.vmem [shape: f32[32], index: 0, kind: input, shape index: {}]
  %s1 = inlined_call_operand.vmem [shape: f32[32], index: 1, kind: output, shape index: {}]
  %v2 = vld [vmem:[%s0] sm:$0x1]
  %3 = xla_tuple %v2
  %4 = xla_tuple %3
  %v5 = vxor.u32 %v2, 2147483648
  %6 = xla_tuple %v5
  %7 = vst [vmem:[%s1] sm:$0x1] %v5

// kernel: tile.28
$region0: #{tile.28}
  #allocation0 [shape = 's32[1]{0}', space=sflag, size = 0x4, scoped, tag = 'scoped memory for tile.28']
  %s0 = inlined_call_operand.vmem [shape: f32[64], index: 0, kind: input, shape index: {}]
  %s1 = inlined_call_operand.vmem [shape: f32[8,64], index: 1, kind: output, shape index: {}]
  // Predicated region
  $region2: #{tile.28} parent=0 // pred_check
    _
  $region3: #{tile.28} parent=0 // pred_check_branch
    %3 = sbr.rel (0) target = $region5
  $region4: #{tile.28} parent=0 // pred_region
    _
  $region5: #{tile.28} parent=0 // pred_fallthru
    _
  %v4 = vld [vmem:[%s0] ss:$0 sm:$0xff]
  %5 = vst [vmem:[%s1] sm:$0xff] %v4

// kernel: tile.29
$region0: #{tile.29}
  %s0 = inlined_call_operand.vmem [shape: f32[8,64], index: 0, kind: input, shape index: {}]
  %s1 = inlined_call_operand.vmem [shape: f32[1,512], index: 1, kind: output, shape index: {}]
  $region1: #{tile.29} parent=0
    #allocation0 [shape = 'u8[16384]{0}', space=vmem, size = 0x4000, scoped, tag = 'scoped mem for output reshape']
    %v2 = vld [vmem:[%s0] ss:$2 sm:$0xf]
    %vm3 = vcmask 523264
    %4 = vst.msk [vmem:[#allocation0] ss:$8 sm:$0xf] %vm3, %v2
    %s5 = scalar_lea.vmem %s0, 1
    %v6 = vld [vmem:[%s5] ss:$2 sm:$0xf]
    %7 = vrot.lane.b32.xlu0 %v6, 64
    %v8 = vpop.permute.xlu0 %7
    %vm9 = vcmask 1048064
    %10 = vst.msk [vmem:[#allocation0] ss:$8 sm:$0xf] %vm9, %v8
    %s12 = sshllo.u32 0, 1
    %v14 = vld [vmem:[#allocation0] sm:%s12]
    %s15 = sshllo.u32 0, 1
    %16 = vst [vmem:[%s1] sm:%s15] %v14
    %s17 = scalar_lea.vmem [#allocation0], 8
    %v18 = vld [vmem:[%s17] sm:%s12]
    %s19 = sshllo.u32 0, 1
    %s20 = scalar_lea.vmem %s1, 1
    %21 = vst [vmem:[%s20] sm:%s19] %v18
    %s22 = scalar_lea.vmem [#allocation0], 16
    %v23 = vld [vmem:[%s22] sm:%s12]
    %s24 = sshllo.u32 0, 1
    %s25 = smul.addr 1, 2
    %s26 = scalar_lea.vmem %s1, %s25
    %27 = vst [vmem:[%s26] sm:%s24] %v23
    %s28 = scalar_lea.vmem [#allocation0], 24
    %v29 = vld [vmem:[%s28] sm:%s12]
    %s30 = sshllo.u32 0, 1
    %s31 = smul.addr 1, 3
    %s32 = scalar_lea.vmem %s1, %s31
    %33 = vst [vmem:[%s32] sm:%s30] %v29

// kernel: property_forward.1
$region0: #{property_forward.1}
  #allocation0 [shape = 'u32[]', space=smem, size = 0x4, offset = 0x4, fixed_abs, tag = 'smem constant byte address 0x4 - core index']
  #allocation1 [shape = 'u32[144,128]{1,0:T(1,128)}', space=vmem, size = 0x12000, scoped, tag = 'internal scratch']
  %s0 = inlined_call_operand.vmem [shape: f32[8,256], index: 0, kind: input, shape index: {}]
  %s1 = inlined_call_operand.vmem [shape: f32[256,512], index: 1, kind: input, shape index: {}]
  %s2 = inlined_call_operand.vmem [shape: f32[1,512], index: 2, kind: input, shape index: {}]
  %s3 = inlined_call_operand.vmem [shape: f32[1,512], index: 3, kind: input, shape index: {}]
  %s4 = inlined_call_operand.vmem [shape: f32[1,512], index: 4, kind: input, shape index: {}]
  %s5 = inlined_call_operand.vmem [shape: f32[2,3,3], index: 5, kind: output, shape index: {}]
  %s6 = sld [smem:[#allocation0]]
  $region30: #{property_forward.1} parent=0
    _
  %s8 = ssub.s32 1, %s6
  %s9 = scalar_select 0, %s8, %s6
  // Predicated region
  $region2: #{property_forward.1} parent=0 // pred_check
    _
  $region3: #{property_forward.1} parent=0 // pred_check_branch
    %11 = sbr.rel (0) target = $region5
  $region4: #{property_forward.1} parent=0 // pred_region
    _
  $region5: #{property_forward.1} parent=0 // pred_fallthru
    _
  // Predicated region
  $region6: #{property_forward.1} parent=0 // pred_check
    _
  $region7: #{property_forward.1} parent=0 // pred_check_branch
    %13 = sbr.rel (0) target = $region9
  $region8: #{property_forward.1} parent=0 // pred_region
    _
  $region9: #{property_forward.1} parent=0 // pred_fallthru
    _
  // Predicated region
  $region10: #{property_forward.1} parent=0 // pred_check
    _
  $region11: #{property_forward.1} parent=0 // pred_check_branch
    %15 = sbr.rel (0) target = $region13
  $region12: #{property_forward.1} parent=0 // pred_region
    _
  $region13: #{property_forward.1} parent=0 // pred_fallthru
    _
  // Predicated region
  $region14: #{property_forward.1} parent=0 // pred_check
    _
  $region15: #{property_forward.1} parent=0 // pred_check_branch
    %17 = sbr.rel (0) target = $region17
  $region16: #{property_forward.1} parent=0 // pred_region
    _
  $region17: #{property_forward.1} parent=0 // pred_fallthru
    _
  // Predicated region
  $region18: #{property_forward.1} parent=0 // pred_check
    _
  $region19: #{property_forward.1} parent=0 // pred_check_branch
    %19 = sbr.rel (0) target = $region21
  $region20: #{property_forward.1} parent=0 // pred_region
    _
  $region21: #{property_forward.1} parent=0 // pred_fallthru
    _
  %v20 = vld [vmem:[%s0] sm:$0xff]
  %v21 = vld [vmem:[%s0 + $0x8] sm:$0xff]
  %v22 = vld [vmem:[%s1] sm:$0xff]
  %v23 = vld [vmem:[%s1 + $0x8] sm:$0xff]
  %v24 = vld [vmem:[%s1 + $0x10] sm:$0xff]
  %v25 = vld [vmem:[%s1 + $0x18] sm:$0xff]
  %v26 = vld [vmem:[%s1 + $0x20] sm:$0xff]
  %v27 = vld [vmem:[%s1 + $0x28] sm:$0xff]
  %v28 = vld [vmem:[%s1 + $0x30] sm:$0xff]
  %v29 = vld [vmem:[%s1 + $0x38] sm:$0xff]
  %v30 = vld [vmem:[%s1 + $0x40] sm:$0xff]
  %v31 = vld [vmem:[%s1 + $0x48] sm:$0xff]
  %v32 = vld [vmem:[%s1 + $0x50] sm:$0xff]
  %v33 = vld [vmem:[%s1 + $0x58] sm:$0xff]
  %v34 = vld [vmem:[%s1 + $0x60] sm:$0xff]
  %v35 = vld [vmem:[%s1 + $0x68] sm:$0xff]
  %v36 = vld [vmem:[%s1 + $0x70] sm:$0xff]
  %v37 = vld [vmem:[%s1 + $0x78] sm:$0xff]
  %v38 = vld [vmem:[%s1 + $0x80] sm:$0xff]
  %v39 = vld [vmem:[%s1 + $0x88] sm:$0xff]
  %v40 = vld [vmem:[%s1 + $0x90] sm:$0xff]
  %v41 = vld [vmem:[%s1 + $0x98] sm:$0xff]
  %v42 = vld [vmem:[%s1 + $0xa0] sm:$0xff]
  %v43 = vld [vmem:[%s1 + $0xa8] sm:$0xff]
  %v44 = vld [vmem:[%s1 + $0xb0] sm:$0xff]
  %v45 = vld [vmem:[%s1 + $0xb8] sm:$0xff]
  %v46 = vld [vmem:[%s1 + $0xc0] sm:$0xff]
  %v47 = vld [vmem:[%s1 + $0xc8] sm:$0xff]
  %v48 = vld [vmem:[%s1 + $0xd0] sm:$0xff]
  %v49 = vld [vmem:[%s1 + $0xd8] sm:$0xff]
  %v50 = vld [vmem:[%s1 + $0xe0] sm:$0xff]
  %v51 = vld [vmem:[%s1 + $0xe8] sm:$0xff]
  %v52 = vld [vmem:[%s1 + $0xf0] sm:$0xff]
  %v53 = vld [vmem:[%s1 + $0xf8] sm:$0xff]
  %v54 = vld [vmem:[%s1 + $0x100] sm:$0xff]
  %v55 = vld [vmem:[%s1 + $0x108] sm:$0xff]
  %v56 = vld [vmem:[%s1 + $0x110] sm:$0xff]
  %v57 = vld [vmem:[%s1 + $0x118] sm:$0xff]
  %v58 = vld [vmem:[%s1 + $0x120] sm:$0xff]
  %v59 = vld [vmem:[%s1 + $0x128] sm:$0xff]
  %v60 = vld [vmem:[%s1 + $0x130] sm:$0xff]
  %v61 = vld [vmem:[%s1 + $0x138] sm:$0xff]
  %v62 = vld [vmem:[%s1 + $0x140] sm:$0xff]
  %v63 = vld [vmem:[%s1 + $0x148] sm:$0xff]
  %v64 = vld [vmem:[%s1 + $0x150] sm:$0xff]
  %v65 = vld [vmem:[%s1 + $0x158] sm:$0xff]
  %v66 = vld [vmem:[%s1 + $0x160] sm:$0xff]
  %v67 = vld [vmem:[%s1 + $0x168] sm:$0xff]
  %v68 = vld [vmem:[%s1 + $0x170] sm:$0xff]
  %v69 = vld [vmem:[%s1 + $0x178] sm:$0xff]
  %v70 = vld [vmem:[%s1 + $0x180] sm:$0xff]
  %v71 = vld [vmem:[%s1 + $0x188] sm:$0xff]
  %v72 = vld [vmem:[%s1 + $0x190] sm:$0xff]
  %v73 = vld [vmem:[%s1 + $0x198] sm:$0xff]
  %v74 = vld [vmem:[%s1 + $0x1a0] sm:$0xff]
  %v75 = vld [vmem:[%s1 + $0x1a8] sm:$0xff]
  %v76 = vld [vmem:[%s1 + $0x1b0] sm:$0xff]
  %v77 = vld [vmem:[%s1 + $0x1b8] sm:$0xff]
  %v78 = vld [vmem:[%s1 + $0x1c0] sm:$0xff]
  %v79 = vld [vmem:[%s1 + $0x1c8] sm:$0xff]
  %v80 = vld [vmem:[%s1 + $0x1d0] sm:$0xff]
  %v81 = vld [vmem:[%s1 + $0x1d8] sm:$0xff]
  %v82 = vld [vmem:[%s1 + $0x1e0] sm:$0xff]
  %v83 = vld [vmem:[%s1 + $0x1e8] sm:$0xff]
  %v84 = vld [vmem:[%s1 + $0x1f0] sm:$0xff]
  %v85 = vld [vmem:[%s1 + $0x1f8] sm:$0xff]
  %v86 = vld [vmem:[%s1 + $0x200] sm:$0xff]
  %v87 = vld [vmem:[%s1 + $0x208] sm:$0xff]
  %v88 = vld [vmem:[%s1 + $0x210] sm:$0xff]
  %v89 = vld [vmem:[%s1 + $0x218] sm:$0xff]
  %v90 = vld [vmem:[%s1 + $0x220] sm:$0xff]
  %v91 = vld [vmem:[%s1 + $0x228] sm:$0xff]
  %v92 = vld [vmem:[%s1 + $0x230] sm:$0xff]
  %v93 = vld [vmem:[%s1 + $0x238] sm:$0xff]
  %v94 = vld [vmem:[%s1 + $0x240] sm:$0xff]
  %v95 = vld [vmem:[%s1 + $0x248] sm:$0xff]
  %v96 = vld [vmem:[%s1 + $0x250] sm:$0xff]
  %v97 = vld [vmem:[%s1 + $0x258] sm:$0xff]
  %v98 = vld [vmem:[%s1 + $0x260] sm:$0xff]
  %v99 = vld [vmem:[%s1 + $0x268] sm:$0xff]
  %v100 = vld [vmem:[%s1 + $0x270] sm:$0xff]
  %v101 = vld [vmem:[%s1 + $0x278] sm:$0xff]
  %v102 = vld [vmem:[%s1 + $0x280] sm:$0xff]
  %v103 = vld [vmem:[%s1 + $0x288] sm:$0xff]
  %v104 = vld [vmem:[%s1 + $0x290] sm:$0xff]
  %v105 = vld [vmem:[%s1 + $0x298] sm:$0xff]
  %v106 = vld [vmem:[%s1 + $0x2a0] sm:$0xff]
  %v107 = vld [vmem:[%s1 + $0x2a8] sm:$0xff]
  %v108 = vld [vmem:[%s1 + $0x2b0] sm:$0xff]
  %v109 = vld [vmem:[%s1 + $0x2b8] sm:$0xff]
  %v110 = vld [vmem:[%s1 + $0x2c0] sm:$0xff]
  %v111 = vld [vmem:[%s1 + $0x2c8] sm:$0xff]
  %v112 = vld [vmem:[%s1 + $0x2d0] sm:$0xff]
  %v113 = vld [vmem:[%s1 + $0x2d8] sm:$0xff]
  %v114 = vld [vmem:[%s1 + $0x2e0] sm:$0xff]
  %v115 = vld [vmem:[%s1 + $0x2e8] sm:$0xff]
  %v116 = vld [vmem:[%s1 + $0x2f0] sm:$0xff]
  %v117 = vld [vmem:[%s1 + $0x2f8] sm:$0xff]
  %v118 = vld [vmem:[%s1 + $0x300] sm:$0xff]
  %v119 = vld [vmem:[%s1 + $0x308] sm:$0xff]
  %v120 = vld [vmem:[%s1 + $0x310] sm:$0xff]
  %v121 = vld [vmem:[%s1 + $0x318] sm:$0xff]
  %v122 = vld [vmem:[%s1 + $0x320] sm:$0xff]
  %v123 = vld [vmem:[%s1 + $0x328] sm:$0xff]
  %v124 = vld [vmem:[%s1 + $0x330] sm:$0xff]
  %v125 = vld [vmem:[%s1 + $0x338] sm:$0xff]
  %v126 = vld [vmem:[%s1 + $0x340] sm:$0xff]
  %v127 = vld [vmem:[%s1 + $0x348] sm:$0xff]
  %v128 = vld [vmem:[%s1 + $0x350] sm:$0xff]
  %v129 = vld [vmem:[%s1 + $0x358] sm:$0xff]
  %v130 = vld [vmem:[%s1 + $0x360] sm:$0xff]
  %v131 = vld [vmem:[%s1 + $0x368] sm:$0xff]
  %v132 = vld [vmem:[%s1 + $0x370] sm:$0xff]
  %v133 = vld [vmem:[%s1 + $0x378] sm:$0xff]
  %v134 = vld [vmem:[%s1 + $0x380] sm:$0xff]
  %v135 = vld [vmem:[%s1 + $0x388] sm:$0xff]
  %v136 = vld [vmem:[%s1 + $0x390] sm:$0xff]
  %v137 = vld [vmem:[%s1 + $0x398] sm:$0xff]
  %v138 = vld [vmem:[%s1 + $0x3a0] sm:$0xff]
  %v139 = vld [vmem:[%s1 + $0x3a8] sm:$0xff]
  %v140 = vld [vmem:[%s1 + $0x3b0] sm:$0xff]
  %v141 = vld [vmem:[%s1 + $0x3b8] sm:$0xff]
  %v142 = vld [vmem:[%s1 + $0x3c0] sm:$0xff]
  %v143 = vld [vmem:[%s1 + $0x3c8] sm:$0xff]
  %v144 = vld [vmem:[%s1 + $0x3d0] sm:$0xff]
  %v145 = vld [vmem:[%s1 + $0x3d8] sm:$0xff]
  %v146 = vld [vmem:[%s1 + $0x3e0] sm:$0xff]
  %v147 = vld [vmem:[%s1 + $0x3e8] sm:$0xff]
  %v148 = vld [vmem:[%s1 + $0x3f0] sm:$0xff]
  %v149 = vld [vmem:[%s1 + $0x3f8] sm:$0xff]
  %150 = vmatprep.subr.mxu0 %v23
  %151 = vmatpush1.msra.mxu0 %v22
  %152 = vmatprep.subr.mxu0 %v27
  %153 = vmatpush1.msra.mxu0 %v26
  %154 = vmatprep.subr.mxu0 %v31
  %155 = vmatpush1.msra.mxu0 %v30
  %156 = vmatprep.subr.mxu0 %v35
  %157 = vmatpush1.msra.mxu0 %v34
  %158 = vmatprep.subr.mxu0 %v39
  %159 = vmatpush1.msra.mxu0 %v38
  %160 = vmatprep.subr.mxu0 %v43
  %161 = vmatpush1.msra.mxu0 %v42
  %162 = vmatprep.subr.mxu0 %v47
  %163 = vmatpush1.msra.mxu0 %v46
  %164 = vmatprep.subr.mxu0 %v51
  %165 = vmatpush1.msra.mxu0 %v50
  %166 = vmatprep.subr.mxu0 %v55
  %167 = vmatpush1.msra.mxu0 %v54
  %168 = vmatprep.subr.mxu0 %v59
  %169 = vmatpush1.msra.mxu0 %v58
  %170 = vmatprep.subr.mxu0 %v63
  %171 = vmatpush1.msra.mxu0 %v62
  %172 = vmatprep.subr.mxu0 %v67
  %173 = vmatpush1.msra.mxu0 %v66
  %174 = vmatprep.subr.mxu0 %v71
  %175 = vmatpush1.msra.mxu0 %v70
  %176 = vmatprep.subr.mxu0 %v75
  %177 = vmatpush1.msra.mxu0 %v74
  %178 = vmatprep.subr.mxu0 %v79
  %179 = vmatpush1.msra.mxu0 %v78
  %180 = vmatprep.subr.mxu0 %v83
  %181 = vmatpush1.msra.mxu0 %v82
  %182 = vmatprep.subr.mxu0 %v87
  %183 = vmatpush1.msra.mxu0 %v86
  %184 = vmatprep.subr.mxu0 %v91
  %185 = vmatpush1.msra.mxu0 %v90
  %186 = vmatprep.subr.mxu0 %v95
  %187 = vmatpush1.msra.mxu0 %v94
  %188 = vmatprep.subr.mxu0 %v99
  %189 = vmatpush1.msra.mxu0 %v98
  %190 = vmatprep.subr.mxu0 %v103
  %191 = vmatpush1.msra.mxu0 %v102
  %192 = vmatprep.subr.mxu0 %v107
  %193 = vmatpush1.msra.mxu0 %v106
  %194 = vmatprep.subr.mxu0 %v111
  %195 = vmatpush1.msra.mxu0 %v110
  %196 = vmatprep.subr.mxu0 %v115
  %197 = vmatpush1.msra.mxu0 %v114
  %198 = vmatprep.subr.mxu0 %v119
  %199 = vmatpush1.msra.mxu0 %v118
  %200 = vmatprep.subr.mxu0 %v123
  %201 = vmatpush1.msra.mxu0 %v122
  %202 = vmatprep.subr.mxu0 %v127
  %203 = vmatpush1.msra.mxu0 %v126
  %204 = vmatprep.subr.mxu0 %v131
  %205 = vmatpush1.msra.mxu0 %v130
  %206 = vmatprep.subr.mxu0 %v135
  %207 = vmatpush1.msra.mxu0 %v134
  %208 = vmatprep.subr.mxu0 %v139
  %209 = vmatpush1.msra.mxu0 %v138
  %210 = vmatprep.subr.mxu0 %v143
  %211 = vmatpush1.msra.mxu0 %v142
  %212 = vmatprep.subr.mxu0 %v147
  %213 = vmatpush1.msra.mxu0 %v146
  %214 = vmatprep.mubr.f32.mxu0 %v21
  %215 = vmatmul.mubr.f32.gmra.mrb[0].mxu0 %v20
  %v216 = vpop.f32.mrb[0].mxu0
  %v217 = vadd.f32 0.0, %v216
  %v218 = vpop.f32.mrb[0].mxu0
  %v219 = vadd.f32 0.0, %v218
  %220 = vdwg.mxu0
  %221 = vmatprep.subr.mxu0 %v25
  %222 = vmatpush1.msra.mxu0 %v24
  %223 = vmatprep.subr.mxu0 %v29
  %224 = vmatpush1.msra.mxu0 %v28
  %225 = vmatprep.subr.mxu0 %v33
  %226 = vmatpush1.msra.mxu0 %v32
  %227 = vmatprep.subr.mxu0 %v37
  %228 = vmatpush1.msra.mxu0 %v36
  %229 = vmatprep.subr.mxu0 %v41
  %230 = vmatpush1.msra.mxu0 %v40
  %231 = vmatprep.subr.mxu0 %v45
  %232 = vmatpush1.msra.mxu0 %v44
  %233 = vmatprep.subr.mxu0 %v49
  %234 = vmatpush1.msra.mxu0 %v48
  %235 = vmatprep.subr.mxu0 %v53
  %236 = vmatpush1.msra.mxu0 %v52
  %237 = vmatprep.subr.mxu0 %v57
  %238 = vmatpush1.msra.mxu0 %v56
  %239 = vmatprep.subr.mxu0 %v61
  %240 = vmatpush1.msra.mxu0 %v60
  %241 = vmatprep.subr.mxu0 %v65
  %242 = vmatpush1.msra.mxu0 %v64
  %243 = vmatprep.subr.mxu0 %v69
  %244 = vmatpush1.msra.mxu0 %v68
  %245 = vmatprep.subr.mxu0 %v73
  %246 = vmatpush1.msra.mxu0 %v72
  %247 = vmatprep.subr.mxu0 %v77
  %248 = vmatpush1.msra.mxu0 %v76
  %249 = vmatprep.subr.mxu0 %v81
  %250 = vmatpush1.msra.mxu0 %v80
  %251 = vmatprep.subr.mxu0 %v85
  %252 = vmatpush1.msra.mxu0 %v84
  %253 = vmatprep.subr.mxu0 %v89
  %254 = vmatpush1.msra.mxu0 %v88
  %255 = vmatprep.subr.mxu0 %v93
  %256 = vmatpush1.msra.mxu0 %v92
  %257 = vmatprep.subr.mxu0 %v97
  %258 = vmatpush1.msra.mxu0 %v96
  %259 = vmatprep.subr.mxu0 %v101
  %260 = vmatpush1.msra.mxu0 %v100
  %261 = vmatprep.subr.mxu0 %v105
  %262 = vmatpush1.msra.mxu0 %v104
  %263 = vmatprep.subr.mxu0 %v109
  %264 = vmatpush1.msra.mxu0 %v108
  %265 = vmatprep.subr.mxu0 %v113
  %266 = vmatpush1.msra.mxu0 %v112
  %267 = vmatprep.subr.mxu0 %v117
  %268 = vmatpush1.msra.mxu0 %v116
  %269 = vmatprep.subr.mxu0 %v121
  %270 = vmatpush1.msra.mxu0 %v120
  %271 = vmatprep.subr.mxu0 %v125
  %272 = vmatpush1.msra.mxu0 %v124
  %273 = vmatprep.subr.mxu0 %v129
  %274 = vmatpush1.msra.mxu0 %v128
  %275 = vmatprep.subr.mxu0 %v133
  %276 = vmatpush1.msra.mxu0 %v132
  %277 = vmatprep.subr.mxu0 %v137
  %278 = vmatpush1.msra.mxu0 %v136
  %279 = vmatprep.subr.mxu0 %v141
  %280 = vmatpush1.msra.mxu0 %v140
  %281 = vmatprep.subr.mxu0 %v145
  %282 = vmatpush1.msra.mxu0 %v144
  %283 = vmatprep.subr.mxu0 %v149
  %284 = vmatpush1.msra.mxu0 %v148
  %285 = vmatprep.mubr.f32.mxu0 %v21
  %286 = vmatmul.mubr.f32.gmra.mrb[0].mxu0 %v20
  %v287 = vpop.f32.mrb[0].mxu0
  %v288 = vadd.f32 0.0, %v287
  %v289 = vpop.f32.mrb[0].mxu0
  %v290 = vadd.f32 0.0, %v289
  %291 = vdwg.mxu0
  %v292 = vld [vmem:[%s2] sm:$0xf]
  %v294 = vlaneseq
  %v295 = vshrl.u32 %v294, 7
  %v296 = vsub.s32 0, %v295
  %v297 = vrot.slane %v292, %v296
  %v298 = vlaneseq
  %v299 = vshrl.u32 %v298, 7
  %v300 = vsub.s32 1, %v299
  %v301 = vrot.slane %v292, %v300
  %v302 = vlaneseq
  %v303 = vshrl.u32 %v302, 7
  %v304 = vsub.s32 2, %v303
  %v305 = vrot.slane %v292, %v304
  %v306 = vlaneseq
  %v307 = vshrl.u32 %v306, 7
  %v308 = vsub.s32 3, %v307
  %v309 = vrot.slane %v292, %v308
  %v314 = vadd.f32 %v217, %v297
  %v315 = vadd.f32 %v219, %v301
  %v316 = vadd.f32 %v288, %v305
  %v317 = vadd.f32 %v290, %v309
  %v318 = vtanh.pop %v314
  %v319 = vtanh.pop %v315
  %v320 = vtanh.pop %v316
  %v321 = vtanh.pop %v317
  %v322 = vmul.f32 %v318, %v318
  %v323 = vmul.f32 %v319, %v319
  %v324 = vmul.f32 %v320, %v320
  %v325 = vmul.f32 %v321, %v321
  %v326 = vsub.f32 1.0, %v322
  %v327 = vsub.f32 1.0, %v323
  %v328 = vsub.f32 1.0, %v324
  %v329 = vsub.f32 1.0, %v325
  %v330 = vld [vmem:[%s3] sm:$0xf]
  %v332 = vlaneseq
  %v333 = vshrl.u32 %v332, 7
  %v334 = vsub.s32 0, %v333
  %v335 = vrot.slane %v330, %v334
  %v336 = vlaneseq
  %v337 = vshrl.u32 %v336, 7
  %v338 = vsub.s32 1, %v337
  %v339 = vrot.slane %v330, %v338
  %v340 = vlaneseq
  %v341 = vshrl.u32 %v340, 7
  %v342 = vsub.s32 2, %v341
  %v343 = vrot.slane %v330, %v342
  %v344 = vlaneseq
  %v345 = vshrl.u32 %v344, 7
  %v346 = vsub.s32 3, %v345
  %v347 = vrot.slane %v330, %v346
  %v352 = vmul.f32 %v326, %v335
  %v353 = vmul.f32 %v327, %v339
  %v354 = vmul.f32 %v328, %v343
  %v355 = vmul.f32 %v329, %v347
  %v356 = vmul.f32 %v318, -2.0
  %v357 = vmul.f32 %v319, -2.0
  %v358 = vmul.f32 %v320, -2.0
  %v359 = vmul.f32 %v321, -2.0
  %v360 = vmul.f32 %v356, %v352
  %v361 = vmul.f32 %v357, %v353
  %v362 = vmul.f32 %v358, %v354
  %v363 = vmul.f32 %v359, %v355
  %v364 = vld [vmem:[%s4] sm:$0xf]
  %v366 = vlaneseq
  %v367 = vshrl.u32 %v366, 7
  %v368 = vsub.s32 0, %v367
  %v369 = vrot.slane %v364, %v368
  %v370 = vlaneseq
  %v371 = vshrl.u32 %v370, 7
  %v372 = vsub.s32 1, %v371
  %v373 = vrot.slane %v364, %v372
  %v374 = vlaneseq
  %v375 = vshrl.u32 %v374, 7
  %v376 = vsub.s32 2, %v375
  %v377 = vrot.slane %v364, %v376
  %v378 = vlaneseq
  %v379 = vshrl.u32 %v378, 7
  %v380 = vsub.s32 3, %v379
  %v381 = vrot.slane %v364, %v380
  %v386 = vmul.f32 %v352, %v369
  %v387 = vmul.f32 %v353, %v373
  %v388 = vmul.f32 %v354, %v377
  %v389 = vmul.f32 %v355, %v381
  %vm390 = vcmask 1041408
  %v391 = vsel %vm390, %v386, 0.0
  %v392 = vsel %vm390, %v387, 0.0
  %v393 = vadd.f32 %v391, %v392
  %v394 = vsel %vm390, %v388, 0.0
  %v395 = vadd.f32 %v393, %v394
  %v396 = vsel %vm390, %v389, 0.0
  %v397 = vadd.f32 %v395, %v396
  %398 = vadd.xlane.f32.xlu0 %v397
  %v399 = vpop.xlane.xlu0 %398
  %v400 = vlaneseq
  %v401 = vshrl.u32 %v400, 7
  %v402 = vlaneseq
  %v403 = vand.u32 %v402, 127
  %vm404 = vcmp.eq.s32.totalorder %v401, %v403
  %v405 = vsel %vm404, 1, 0
  %v406 = vcvt.s32.f32 %v405
  %v407 = vlaneseq
  %v408 = vshrl.u32 %v407, 7
  %v409 = vsub.s32 0, %v408
  %v410 = vrot.slane %v360, %v409
  %v411 = vlaneseq
  %v412 = vshrl.u32 %v411, 7
  %v413 = vsub.s32 0, %v412
  %v414 = vrot.slane %v361, %v413
  %v415 = vlaneseq
  %v416 = vshrl.u32 %v415, 7
  %v417 = vsub.s32 0, %v416
  %v418 = vrot.slane %v362, %v417
  %v419 = vlaneseq
  %v420 = vshrl.u32 %v419, 7
  %v421 = vsub.s32 0, %v420
  %v422 = vrot.slane %v363, %v421
  %v423 = vmul.f32 %v217, %v410
  %v424 = vmul.f32 %v219, %v414
  %v425 = vmul.f32 %v288, %v418
  %v426 = vmul.f32 %v290, %v422
  %v431 = vrot.slane %v423, 2
  %v432 = vrot.slane %v424, 2
  %v433 = vrot.slane %v425, 2
  %v434 = vrot.slane %v426, 2
  %v443 = vrot.slane %v217, 2
  %v444 = vrot.slane %v219, 2
  %v445 = vrot.slane %v288, 2
  %v446 = vrot.slane %v290, 2
  %451 = vmatprep.subr.mxu0 %v444
  %452 = vmatpush1.xpose.msra.mxu0 %v443
  %453 = vmatprep.subr.mxu0 0.0
  %454 = vmatpush1.xpose.msra.mxu0 0.0
  %455 = vmatprep.subr.mxu0 0.0
  %456 = vmatpush1.xpose.msra.mxu0 0.0
  %457 = vmatprep.subr.mxu0 0.0
  %458 = vmatpush1.xpose.msra.mxu0 0.0
  %459 = vmatprep.subr.mxu0 0.0
  %460 = vmatpush1.xpose.msra.mxu0 0.0
  %461 = vmatprep.subr.mxu0 0.0
  %462 = vmatpush1.xpose.msra.mxu0 0.0
  %463 = vmatprep.subr.mxu0 0.0
  %464 = vmatpush1.xpose.msra.mxu0 0.0
  %465 = vmatprep.subr.mxu0 0.0
  %466 = vmatpush1.xpose.msra.mxu0 0.0
  %467 = vmatprep.subr.mxu0 0.0
  %468 = vmatpush1.xpose.msra.mxu0 0.0
  %469 = vmatprep.subr.mxu0 0.0
  %470 = vmatpush1.xpose.msra.mxu0 0.0
  %471 = vmatprep.subr.mxu0 0.0
  %472 = vmatpush1.xpose.msra.mxu0 0.0
  %473 = vmatprep.subr.mxu0 0.0
  %474 = vmatpush1.xpose.msra.mxu0 0.0
  %475 = vmatprep.subr.mxu0 0.0
  %476 = vmatpush1.xpose.msra.mxu0 0.0
  %477 = vmatprep.subr.mxu0 0.0
  %478 = vmatpush1.xpose.msra.mxu0 0.0
  %479 = vmatprep.subr.mxu0 0.0
  %480 = vmatpush1.xpose.msra.mxu0 0.0
  %481 = vmatprep.subr.mxu0 0.0
  %482 = vmatpush1.xpose.msra.mxu0 0.0
  %483 = vmatprep.subr.mxu0 0.0
  %484 = vmatpush1.xpose.msra.mxu0 0.0
  %485 = vmatprep.subr.mxu0 0.0
  %486 = vmatpush1.xpose.msra.mxu0 0.0
  %487 = vmatprep.subr.mxu0 0.0
  %488 = vmatpush1.xpose.msra.mxu0 0.0
  %489 = vmatprep.subr.mxu0 0.0
  %490 = vmatpush1.xpose.msra.mxu0 0.0
  %491 = vmatprep.subr.mxu0 0.0
  %492 = vmatpush1.xpose.msra.mxu0 0.0
  %493 = vmatprep.subr.mxu0 0.0
  %494 = vmatpush1.xpose.msra.mxu0 0.0
  %495 = vmatprep.subr.mxu0 0.0
  %496 = vmatpush1.xpose.msra.mxu0 0.0
  %497 = vmatprep.subr.mxu0 0.0
  %498 = vmatpush1.xpose.msra.mxu0 0.0
  %499 = vmatprep.subr.mxu0 0.0
  %500 = vmatpush1.xpose.msra.mxu0 0.0
  %501 = vmatprep.subr.mxu0 0.0
  %502 = vmatpush1.xpose.msra.mxu0 0.0
  %503 = vmatprep.subr.mxu0 0.0
  %504 = vmatpush1.xpose.msra.mxu0 0.0
  %505 = vmatprep.subr.mxu0 0.0
  %506 = vmatpush1.xpose.msra.mxu0 0.0
  %507 = vmatprep.subr.mxu0 0.0
  %508 = vmatpush1.xpose.msra.mxu0 0.0
  %509 = vmatprep.subr.mxu0 0.0
  %510 = vmatpush1.xpose.msra.mxu0 0.0
  %511 = vmatprep.subr.mxu0 0.0
  %512 = vmatpush1.xpose.msra.mxu0 0.0
  %513 = vmatprep.subr.mxu0 0.0
  %514 = vmatpush1.xpose.msra.mxu0 0.0
  %515 = vmatprep.mubr.f32.mxu0 %v432
  %516 = vmatmul.mubr.f32.gmra.mrb[0].mxu0 %v431
  %v517 = vpop.f32.mrb[0].mxu0
  %v518 = vadd.f32 0.0, %v517
  %v519 = vpop.f32.mrb[0].mxu0
  %520 = vdwg.mxu0
  %521 = vmatprep.subr.mxu0 %v446
  %522 = vmatpush1.xpose.msra.mxu0 %v445
  %523 = vmatprep.subr.mxu0 0.0
  %524 = vmatpush1.xpose.msra.mxu0 0.0
  %525 = vmatprep.subr.mxu0 0.0
  %526 = vmatpush1.xpose.msra.mxu0 0.0
  %527 = vmatprep.subr.mxu0 0.0
  %528 = vmatpush1.xpose.msra.mxu0 0.0
  %529 = vmatprep.subr.mxu0 0.0
  %530 = vmatpush1.xpose.msra.mxu0 0.0
  %531 = vmatprep.subr.mxu0 0.0
  %532 = vmatpush1.xpose.msra.mxu0 0.0
  %533 = vmatprep.subr.mxu0 0.0
  %534 = vmatpush1.xpose.msra.mxu0 0.0
  %535 = vmatprep.subr.mxu0 0.0
  %536 = vmatpush1.xpose.msra.mxu0 0.0
  %537 = vmatprep.subr.mxu0 0.0
  %538 = vmatpush1.xpose.msra.mxu0 0.0
  %539 = vmatprep.subr.mxu0 0.0
  %540 = vmatpush1.xpose.msra.mxu0 0.0
  %541 = vmatprep.subr.mxu0 0.0
  %542 = vmatpush1.xpose.msra.mxu0 0.0
  %543 = vmatprep.subr.mxu0 0.0
  %544 = vmatpush1.xpose.msra.mxu0 0.0
  %545 = vmatprep.subr.mxu0 0.0
  %546 = vmatpush1.xpose.msra.mxu0 0.0
  %547 = vmatprep.subr.mxu0 0.0
  %548 = vmatpush1.xpose.msra.mxu0 0.0
  %549 = vmatprep.subr.mxu0 0.0
  %550 = vmatpush1.xpose.msra.mxu0 0.0
  %551 = vmatprep.subr.mxu0 0.0
  %552 = vmatpush1.xpose.msra.mxu0 0.0
  %553 = vmatprep.subr.mxu0 0.0
  %554 = vmatpush1.xpose.msra.mxu0 0.0
  %555 = vmatprep.subr.mxu0 0.0
  %556 = vmatpush1.xpose.msra.mxu0 0.0
  %557 = vmatprep.subr.mxu0 0.0
  %558 = vmatpush1.xpose.msra.mxu0 0.0
  %559 = vmatprep.subr.mxu0 0.0
  %560 = vmatpush1.xpose.msra.mxu0 0.0
  %561 = vmatprep.subr.mxu0 0.0
  %562 = vmatpush1.xpose.msra.mxu0 0.0
  %563 = vmatprep.subr.mxu0 0.0
  %564 = vmatpush1.xpose.msra.mxu0 0.0
  %565 = vmatprep.subr.mxu0 0.0
  %566 = vmatpush1.xpose.msra.mxu0 0.0
  %567 = vmatprep.subr.mxu0 0.0
  %568 = vmatpush1.xpose.msra.mxu0 0.0
  %569 = vmatprep.subr.mxu0 0.0
  %570 = vmatpush1.xpose.msra.mxu0 0.0
  %571 = vmatprep.subr.mxu0 0.0
  %572 = vmatpush1.xpose.msra.mxu0 0.0
  %573 = vmatprep.subr.mxu0 0.0
  %574 = vmatpush1.xpose.msra.mxu0 0.0
  %575 = vmatprep.subr.mxu0 0.0
  %576 = vmatpush1.xpose.msra.mxu0 0.0
  %577 = vmatprep.subr.mxu0 0.0
  %578 = vmatpush1.xpose.msra.mxu0 0.0
  %579 = vmatprep.subr.mxu0 0.0
  %580 = vmatpush1.xpose.msra.mxu0 0.0
  %581 = vmatprep.subr.mxu0 0.0
  %582 = vmatpush1.xpose.msra.mxu0 0.0
  %583 = vmatprep.subr.mxu0 0.0
  %584 = vmatpush1.xpose.msra.mxu0 0.0
  %585 = vmatprep.mubr.f32.mxu0 %v434
  %586 = vmatmul.mubr.f32.gmra.mrb[0].mxu0 %v433
  %v587 = vpop.f32.mrb[0].mxu0
  %v588 = vadd.f32 %v518, %v587
  %v589 = vpop.f32.mrb[0].mxu0
  %590 = vdwg.mxu0
  %v591 = vmul.f32 %v588, 4.0
  %v592 = vmul.f32 %v399, 2.0
  %v593 = vlaneseq
  %v594 = vshrl.u32 %v593, 7
  %v595 = vsub.s32 0, %v594
  %v596 = vrot.slane %v592, %v595
  %v597 = vmul.f32 %v596, %v406
  %v598 = vadd.f32 %v591, %v597
  %vm599 = vcmask 18432
  %600 = vst.msk [vmem:[%s5] sm:$0x7] %vm599, %v598
  %v601 = vlaneseq
  %v602 = vshrl.u32 %v601, 7
  %v603 = vsub.s32 1, %v602
  %v604 = vrot.slane %v360, %v603
  %v605 = vlaneseq
  %v606 = vshrl.u32 %v605, 7
  %v607 = vsub.s32 1, %v606
  %v608 = vrot.slane %v361, %v607
  %v609 = vlaneseq
  %v610 = vshrl.u32 %v609, 7
  %v611 = vsub.s32 1, %v610
  %v612 = vrot.slane %v362, %v611
  %v613 = vlaneseq
  %v614 = vshrl.u32 %v613, 7
  %v615 = vsub.s32 1, %v614
  %v616 = vrot.slane %v363, %v615
  %v617 = vmul.f32 %v217, %v604
  %v618 = vmul.f32 %v219, %v608
  %v619 = vmul.f32 %v288, %v612
  %v620 = vmul.f32 %v290, %v616
  %v625 = vrot.slane %v617, 5
  %v626 = vrot.slane %v618, 5
  %v627 = vrot.slane %v619, 5
  %v628 = vrot.slane %v620, 5
  %v633 = vrot.slane %v217, 5
  %v634 = vrot.slane %v219, 5
  %v635 = vrot.slane %v288, 5
  %v636 = vrot.slane %v290, 5
  %641 = vmatprep.subr.mxu0 %v634
  %642 = vmatpush1.xpose.msra.mxu0 %v633
  %643 = vmatprep.subr.mxu0 0.0
  %644 = vmatpush1.xpose.msra.mxu0 0.0
  %645 = vmatprep.subr.mxu0 0.0
  %646 = vmatpush1.xpose.msra.mxu0 0.0
  %647 = vmatprep.subr.mxu0 0.0
  %648 = vmatpush1.xpose.msra.mxu0 0.0
  %649 = vmatprep.subr.mxu0 0.0
  %650 = vmatpush1.xpose.msra.mxu0 0.0
  %651 = vmatprep.subr.mxu0 0.0
  %652 = vmatpush1.xpose.msra.mxu0 0.0
  %653 = vmatprep.subr.mxu0 0.0
  %654 = vmatpush1.xpose.msra.mxu0 0.0
  %655 = vmatprep.subr.mxu0 0.0
  %656 = vmatpush1.xpose.msra.mxu0 0.0
  %657 = vmatprep.subr.mxu0 0.0
  %658 = vmatpush1.xpose.msra.mxu0 0.0
  %659 = vmatprep.subr.mxu0 0.0
  %660 = vmatpush1.xpose.msra.mxu0 0.0
  %661 = vmatprep.subr.mxu0 0.0
  %662 = vmatpush1.xpose.msra.mxu0 0.0
  %663 = vmatprep.subr.mxu0 0.0
  %664 = vmatpush1.xpose.msra.mxu0 0.0
  %665 = vmatprep.subr.mxu0 0.0
  %666 = vmatpush1.xpose.msra.mxu0 0.0
  %667 = vmatprep.subr.mxu0 0.0
  %668 = vmatpush1.xpose.msra.mxu0 0.0
  %669 = vmatprep.subr.mxu0 0.0
  %670 = vmatpush1.xpose.msra.mxu0 0.0
  %671 = vmatprep.subr.mxu0 0.0
  %672 = vmatpush1.xpose.msra.mxu0 0.0
  %673 = vmatprep.subr.mxu0 0.0
  %674 = vmatpush1.xpose.msra.mxu0 0.0
  %675 = vmatprep.subr.mxu0 0.0
  %676 = vmatpush1.xpose.msra.mxu0 0.0
  %677 = vmatprep.subr.mxu0 0.0
  %678 = vmatpush1.xpose.msra.mxu0 0.0
  %679 = vmatprep.subr.mxu0 0.0
  %680 = vmatpush1.xpose.msra.mxu0 0.0
  %681 = vmatprep.subr.mxu0 0.0
  %682 = vmatpush1.xpose.msra.mxu0 0.0
  %683 = vmatprep.subr.mxu0 0.0
  %684 = vmatpush1.xpose.msra.mxu0 0.0
  %685 = vmatprep.subr.mxu0 0.0
  %686 = vmatpush1.xpose.msra.mxu0 0.0
  %687 = vmatprep.subr.mxu0 0.0
  %688 = vmatpush1.xpose.msra.mxu0 0.0
  %689 = vmatprep.subr.mxu0 0.0
  %690 = vmatpush1.xpose.msra.mxu0 0.0
  %691 = vmatprep.subr.mxu0 0.0
  %692 = vmatpush1.xpose.msra.mxu0 0.0
  %693 = vmatprep.subr.mxu0 0.0
  %694 = vmatpush1.xpose.msra.mxu0 0.0
  %695 = vmatprep.subr.mxu0 0.0
  %696 = vmatpush1.xpose.msra.mxu0 0.0
  %697 = vmatprep.subr.mxu0 0.0
  %698 = vmatpush1.xpose.msra.mxu0 0.0
  %699 = vmatprep.subr.mxu0 0.0
  %700 = vmatpush1.xpose.msra.mxu0 0.0
  %701 = vmatprep.subr.mxu0 0.0
  %702 = vmatpush1.xpose.msra.mxu0 0.0
  %703 = vmatprep.subr.mxu0 0.0
  %704 = vmatpush1.xpose.msra.mxu0 0.0
  %705 = vmatprep.mubr.f32.mxu0 %v626
  %706 = vmatmul.mubr.f32.gmra.mrb[0].mxu0 %v625
  %v707 = vpop.f32.mrb[0].mxu0
  %v708 = vadd.f32 0.0, %v707
  %v709 = vpop.f32.mrb[0].mxu0
  %710 = vdwg.mxu0
  %711 = vmatprep.subr.mxu0 %v636
  %712 = vmatpush1.xpose.msra.mxu0 %v635
  %713 = vmatprep.subr.mxu0 0.0
  %714 = vmatpush1.xpose.msra.mxu0 0.0
  %715 = vmatprep.subr.mxu0 0.0
  %716 = vmatpush1.xpose.msra.mxu0 0.0
  %717 = vmatprep.subr.mxu0 0.0
  %718 = vmatpush1.xpose.msra.mxu0 0.0
  %719 = vmatprep.subr.mxu0 0.0
  %720 = vmatpush1.xpose.msra.mxu0 0.0
  %721 = vmatprep.subr.mxu0 0.0
  %722 = vmatpush1.xpose.msra.mxu0 0.0
  %723 = vmatprep.subr.mxu0 0.0
  %724 = vmatpush1.xpose.msra.mxu0 0.0
  %725 = vmatprep.subr.mxu0 0.0
  %726 = vmatpush1.xpose.msra.mxu0 0.0
  %727 = vmatprep.subr.mxu0 0.0
  %728 = vmatpush1.xpose.msra.mxu0 0.0
  %729 = vmatprep.subr.mxu0 0.0
  %730 = vmatpush1.xpose.msra.mxu0 0.0
  %731 = vmatprep.subr.mxu0 0.0
  %732 = vmatpush1.xpose.msra.mxu0 0.0
  %733 = vmatprep.subr.mxu0 0.0
  %734 = vmatpush1.xpose.msra.mxu0 0.0
  %735 = vmatprep.subr.mxu0 0.0
  %736 = vmatpush1.xpose.msra.mxu0 0.0
  %737 = vmatprep.subr.mxu0 0.0
  %738 = vmatpush1.xpose.msra.mxu0 0.0
  %739 = vmatprep.subr.mxu0 0.0
  %740 = vmatpush1.xpose.msra.mxu0 0.0
  %741 = vmatprep.subr.mxu0 0.0
  %742 = vmatpush1.xpose.msra.mxu0 0.0
  %743 = vmatprep.subr.mxu0 0.0
  %744 = vmatpush1.xpose.msra.mxu0 0.0
  %745 = vmatprep.subr.mxu0 0.0
  %746 = vmatpush1.xpose.msra.mxu0 0.0
  %747 = vmatprep.subr.mxu0 0.0
  %748 = vmatpush1.xpose.msra.mxu0 0.0
  %749 = vmatprep.subr.mxu0 0.0
  %750 = vmatpush1.xpose.msra.mxu0 0.0
  %751 = vmatprep.subr.mxu0 0.0
  %752 = vmatpush1.xpose.msra.mxu0 0.0
  %753 = vmatprep.subr.mxu0 0.0
  %754 = vmatpush1.xpose.msra.mxu0 0.0
  %755 = vmatprep.subr.mxu0 0.0
  %756 = vmatpush1.xpose.msra.mxu0 0.0
  %757 = vmatprep.subr.mxu0 0.0
  %758 = vmatpush1.xpose.msra.mxu0 0.0
  %759 = vmatprep.subr.mxu0 0.0
  %760 = vmatpush1.xpose.msra.mxu0 0.0
  %761 = vmatprep.subr.mxu0 0.0
  %762 = vmatpush1.xpose.msra.mxu0 0.0
  %763 = vmatprep.subr.mxu0 0.0
  %764 = vmatpush1.xpose.msra.mxu0 0.0
  %765 = vmatprep.subr.mxu0 0.0
  %766 = vmatpush1.xpose.msra.mxu0 0.0
  %767 = vmatprep.subr.mxu0 0.0
  %768 = vmatpush1.xpose.msra.mxu0 0.0
  %769 = vmatprep.subr.mxu0 0.0
  %770 = vmatpush1.xpose.msra.mxu0 0.0
  %771 = vmatprep.subr.mxu0 0.0
  %772 = vmatpush1.xpose.msra.mxu0 0.0
  %773 = vmatprep.subr.mxu0 0.0
  %774 = vmatpush1.xpose.msra.mxu0 0.0
  %775 = vmatprep.mubr.f32.mxu0 %v628
  %776 = vmatmul.mubr.f32.gmra.mrb[0].mxu0 %v627
  %v777 = vpop.f32.mrb[0].mxu0
  %v778 = vadd.f32 %v708, %v777
  %v779 = vpop.f32.mrb[0].mxu0
  %780 = vdwg.mxu0
  %v781 = vmul.f32 %v778, 4.0
  %v782 = vlaneseq
  %v783 = vshrl.u32 %v782, 7
  %v784 = vsub.s32 1, %v783
  %v785 = vrot.slane %v592, %v784
  %v786 = vmul.f32 %v785, %v406
  %v787 = vadd.f32 %v781, %v786
  %s788 = scalar_lea.vmem %s5, 4
  %789 = vst.msk [vmem:[%s788] sm:$0x7] %vm599, %v787
  // Predicated region
  $region22: #{property_forward.1} parent=0 // pred_check
    _
  $region23: #{property_forward.1} parent=0 // pred_check_branch
    %791 = sbr.rel (0) target = $region25
  $region24: #{property_forward.1} parent=0 // pred_region
    _
  $region25: #{property_forward.1} parent=0 // pred_fallthru
    _
  // Predicated region
  $region26: #{property_forward.1} parent=0 // pred_check
    _
  $region27: #{property_forward.1} parent=0 // pred_check_branch
    %793 = sbr.rel (0) target = $region29
  $region28: #{property_forward.1} parent=0 // pred_region
    _
  $region29: #{property_forward.1} parent=0 // pred_fallthru
    _

</llo_original>
